<compile_context>
chip_gen: v6e
topology: v6e:2x2x1
jax: 0.10.0
libtpu: 0.0.40
codegen_flags: <defaults>
</compile_context>

<pallas_src>
import jax
import jax.numpy as jnp
from jax import lax
from jax.experimental import pallas as pl
from jax.experimental.pallas import tpu as pltpu

IN_FEATURES = 512
OUT_FEATURES = 1


def _round_up(x, m):
    return (x + m - 1) // m * m


def linear_kernel(x_ref, w_ref, b_ref, o_ref):
    # x_ref: (TB, K)  streamed per grid step (native dtype)
    # w_ref: (1, K)   VMEM-resident across the grid
    # b_ref: (1,)     f32 scalar in SMEM
    # o_ref: (1, TB)  f32, lane-dense output row
    y = lax.dot_general(
        w_ref[...], x_ref[...],
        dimension_numbers=(((1,), (1,)), ((), ())),   # w @ x^T -> (1, TB)
        preferred_element_type=jnp.float32,
    )
    o_ref[...] = (y + b_ref[0]).astype(o_ref.dtype)


def linear_forward(x, weight, bias, *, tb=8192):
    """x: (B, 512), weight: (1, 512), bias: (1,)  ->  (B, 1) float32."""
    B, K = x.shape
    N = weight.shape[0]          # out_features == 1 for this module

    # Sanitize the batch tile: multiple of 128 (lane dim of the output row,
    # also covers the 8/16-sublane constraint on the x block), clamped so a
    # small batch does not allocate a huge tile.
    tb = max(128, min(int(tb), _round_up(B, 128)))
    tb = _round_up(tb, 128)
    num_tiles = pl.cdiv(B, tb)   # ragged last tile handled by Pallas, no pad

    w = weight.astype(x.dtype)           # tiny (1, 512); matmul dtypes match
    b = bias.astype(jnp.float32)         # (1,) scalar, lives in SMEM

    out = pl.pallas_call(
        linear_kernel,
        out_shape=jax.ShapeDtypeStruct((1, num_tiles * tb), jnp.float32),
        grid_spec=pltpu.PrefetchScalarGridSpec(
            num_scalar_prefetch=0,
            grid=(num_tiles,),
            in_specs=[
                pl.BlockSpec((tb, K), lambda i: (i, 0)),     # x: streamed tiles
                pl.BlockSpec((N, K), lambda i: (0, 0)),      # W: VMEM-resident
                pl.BlockSpec(memory_space=pltpu.MemorySpace.SMEM),  # bias scalar
            ],
            out_specs=pl.BlockSpec((1, tb), lambda i: (0, i)),      # lane-dense
        ),
        compiler_params=pltpu.CompilerParams(
            dimension_semantics=("parallel",),
            # 2 x (tb x 512 x 4B) x-buffers (~32 MiB at TB=8192) + small
            # resident weight + (8, tb) padded output buffers -> < 48 MiB,
            # under v7x's 64 MiB physical VMEM.
            vmem_limit_bytes=48 * 1024 * 1024,
        ),
    )(x, w, b)

    # Valid results occupy the first B lanes of the flattened slab; the
    # overhang of the ragged last tile is undefined and sliced off here.
    return out[0, :B].reshape(B, N)


if __name__ == "__main__":
    key = jax.random.PRNGKey(0)
    k_x, k_w, k_b = jax.random.split(key, 3)

    # Deterministic parameter init mimicking torch.nn.Linear default
    # (uniform in +/- 1/sqrt(in_features)).
    bound = 1.0 / (IN_FEATURES ** 0.5)
    weight = jax.random.uniform(
        k_w, (OUT_FEATURES, IN_FEATURES), jnp.float32, -bound, bound
    )
    bias = jax.random.uniform(
        k_b, (OUT_FEATURES,), jnp.float32, -bound, bound
    )

    # Small batch; B=200 with tb=128 exercises a 2-step grid AND the ragged
    # (partial) last tile path. Production use keeps the default tb=8192.
    B = 200
    x = jax.random.normal(k_x, (B, IN_FEATURES), jnp.float32)

    ref = x @ weight.T + bias  # plain-JAX reference (same semantics as F.linear)

    out = linear_forward(x, weight, bias, tb=128)
    out = jax.block_until_ready(out)
    assert out.shape == (B, OUT_FEATURES)
    assert jnp.allclose(out, ref, atol=2e-2, rtol=2e-2)

    # Default-tb path (clamped to the small batch -> single ragged tile).
    out2 = jax.block_until_ready(linear_forward(x, weight, bias))
    assert out2.shape == (B, OUT_FEATURES)
    assert jnp.allclose(out2, ref, atol=2e-2, rtol=2e-2)

    print("KERNEL_OK")
</pallas_src>

<mosaic_0001>
module attributes {stable_mosaic.version = 11 : i64} {
  func.func @linear_kernel(%arg0: i32, %arg1: memref<128x512xf32, #tpu.memory_space<vmem>>, %arg2: memref<1x512xf32, #tpu.memory_space<vmem>>, %arg3: memref<1xf32, #tpu.memory_space<smem>>, %arg4: memref<1x128xf32, #tpu.memory_space<vmem>>) attributes {dimension_semantics = [#tpu.dimension_semantics<parallel>], iteration_bounds = array<i64: 2>, scalar_prefetch = 0 : i64, scratch_operands = 0 : i64, tpu.core_type = #tpu.core_type<tc>, window_params = [{transform_indices = @transform_0, window_bounds = array<i64: 128, 512>}, {pipeline_mode = #tpu.pipeline_mode<synchronous>, transform_indices = @transform_1, window_bounds = array<i64: 1, 512>}, {transform_indices = @transform_2, window_bounds = array<i64: 1>}, {transform_indices = @transform_3, window_bounds = array<i64: 1, 128>}]} {
    %c0 = arith.constant 0 : index
    %c0_0 = arith.constant 0 : index
    %0 = vector.load %arg2[%c0, %c0_0] : memref<1x512xf32, #tpu.memory_space<vmem>>, vector<1x512xf32>
    %c0_1 = arith.constant 0 : index
    %c0_2 = arith.constant 0 : index
    %1 = vector.load %arg1[%c0_1, %c0_2] : memref<128x512xf32, #tpu.memory_space<vmem>>, vector<128x512xf32>
    %cst = arith.constant dense<0.000000e+00> : vector<1x128xf32>
    %2 = tpu.matmul %0, %1, %cst {dimension_numbers = #tpu.dot_dimension_numbers<[1], [1], [0], [0], [0, 0, 1, 0], [], []>} : vector<1x512xf32>, vector<128x512xf32>, vector<1x128xf32> -> vector<1x128xf32>
    %c0_3 = arith.constant 0 : index
    %3 = memref.load %arg3[%c0_3] : memref<1xf32, #tpu.memory_space<smem>>
    %4 = vector.broadcast %3 : f32 to vector<1x128xf32>
    %5 = arith.addf %2, %4 : vector<1x128xf32>
    %c0_4 = arith.constant 0 : index
    %c0_5 = arith.constant 0 : index
    %6 = vector.load %arg4[%c0_4, %c0_5] : memref<1x128xf32, #tpu.memory_space<vmem>>, vector<1x128xf32>
    tpu.vector_store %arg4[%c0_4, %c0_5], %5 {strides = array<i32>} : memref<1x128xf32, #tpu.memory_space<vmem>>, vector<1x128xf32>,
    return
  }
  func.func @transform_0(%arg0: i32) -> (i32, i32) {
    %c0_i32 = arith.constant 0 : i32
    %c0_i32_0 = arith.constant 0 : i32
    return %arg0, %c0_i32 : i32, i32
  }
  func.func @transform_1(%arg0: i32) -> (i32, i32) {
    %c0_i32 = arith.constant 0 : i32
    %c0_i32_0 = arith.constant 0 : i32
    %c0_i32_1 = arith.constant 0 : i32
    return %c0_i32, %c0_i32_0 : i32, i32
  }
  func.func @transform_2(%arg0: i32) -> i32 {
    %c0_i32 = arith.constant 0 : i32
    %c0_i32_0 = arith.constant 0 : i32
    return %c0_i32 : i32
  }
  func.func @transform_3(%arg0: i32) -> (i32, i32) {
    %c0_i32 = arith.constant 0 : i32
    %c0_i32_0 = arith.constant 0 : i32
    return %c0_i32, %arg0 : i32, i32
  }
}

</mosaic_0001>

<llo_original>
// kernel: tpu_custom_call.1
$region0: #{tpu_custom_call.1}
  #allocation0 [shape = 'u32[]', space=smem, size = 0x4, offset = 0x4, fixed_abs, tag = 'smem constant byte address 0x4 - core index']
  #allocation1 [shape = 'u32[144,128]{1,0:T(1,128)}', space=vmem, size = 0x12000, scoped, tag = 'internal scratch']
  #allocation2 [shape = 'f32[1]{0:T(128)S(6)}', space=smem, size = 0x200, scoped, tag = 'scoped memory for tpu_custom_call.1']
  %s0 = inlined_call_operand.hbm [shape: f32[200,512], index: 0, kind: input, shape index: {}]
  %s1 = inlined_call_operand.hbm [shape: f32[1,512], index: 1, kind: input, shape index: {}]
  %s2 = inlined_call_operand.<no memory space> [shape: f32[1], index: 2, kind: input, shape index: {}]
  %s3 = inlined_call_operand.hbm [shape: f32[1,256], index: 3, kind: output, shape index: {}]
  %s4 = sld [smem:[#allocation0]]
  $region53: #{tpu_custom_call.1} parent=0
    _
  %s6 = ssub.s32 1, %s4
  %s7 = scalar_select 0, %s6, %s4
  %8 = sst [smem:[#allocation2]] %s2
  $region1: #{tpu_custom_call.1} parent=0
    #allocation3 [shape = 'u8[524288]{0}', space=vmem, size = 0x80000, scoped, tag = 'input window, operand 0']
    #allocation4 [shape = 's32[2]{0}', space=sflag, size = 0x8, scoped, tag = 'scoped memory for tpu_custom_call.1']
    #allocation5 [shape = 's32[2]{0}', space=sflag, size = 0x8, scoped, tag = 'scoped memory for tpu_custom_call.1']
    #allocation6 [shape = 'u8[2048]{0}', space=vmem, size = 0x800, scoped, tag = 'input window, operand 1, single buffered']
    #allocation7 [shape = 's32[1]{0}', space=sflag, size = 0x4, scoped, tag = 'scoped memory for tpu_custom_call.1']
    #allocation8 [shape = 'u8[1024]{0}', space=vmem, size = 0x400, scoped, tag = 'output window, operand 0']
    %9 = vsyncpa [#allocation4], 0
    %s10 = scalar_lea.sflag [#allocation4], 1
    %11 = vsyncpa %s10, 0
    %12 = vsyncpa [#allocation7], 0
    %13 = vsyncpa [#allocation5], 0
    %s14 = scalar_lea.sflag [#allocation5], 1
    %15 = vsyncpa %s14, 0
    loop: start=0, step=1, limit=4
    $region2: #{tpu_custom_call.1} parent=1 // loop_pre_header
      _
    $region3: #{tpu_custom_call.1} parent=1 // loop_header
      %s17 = sphi 0, %s21
      %p18 = scmp.ge.s32.totalorder %s17, 4
      %s27 = sphi 0, %s29
      %s30 = sphi 0, %s27
      %s31 = sphi 0, %s30
      %s47 = sphi 0, %s31
      %s51 = sphi 0, %s51
      %s53 = sphi 0, %s51
      %s54 = sphi 0, %s53
      %s68 = sphi 0, %s54
      %s72 = sphi 0, %s72
      %s74 = sphi 0, %s72
      %s75 = sphi 0, %s74
      %s89 = sphi 0, %s75
      %s95 = sphi 0, %s97
      %s98 = sphi 0, %s95
      %s99 = sphi 0, %s98
      %s115 = sphi 0, %s99
    $region4: #{tpu_custom_call.1} parent=1 // loop_header_branch
      %20 = sbr.rel (%p18) target = $region8
    $region5: #{tpu_custom_call.1} parent=1 // loop_body
      %s22 = ssub.s32 %s17, 1
      %s23 = ssub.s32 %s17, 2
      %s24 = sadd.s32 %s17, 1
      %s25 = ssub.s32 %s17, %s24
      %p26 = scmp.eq.s32.totalorder %s25, 0
      %s28 = sadd.s32 %s27, 1
      %s29 = scalar_select %p26, %s27, %s28
      %p32 = pneg %p26
      %p33 = scmp.eq.s32.totalorder %s17, 1
      %p34 = por %p32, %p33
      %p35 = scmp.ne.s32.totalorder %s27, %s30
      %p36 = scmp.eq.s32.totalorder %s17, 0
      %p37 = por %p35, %p36
      %p38 = scmp.ne.s32.totalorder %s27, %s30
      %p39 = scmp.eq.s32.totalorder %s22, 1
      %p40 = por %p38, %p39
      %p41 = scmp.ne.s32.totalorder %s30, %s31
      %p42 = scmp.eq.s32.totalorder %s22, 0
      %p43 = por %p41, %p42
      %p44 = scmp.ne.s32.totalorder %s30, %s31
      %p45 = scmp.eq.s32.totalorder %s23, 1
      %p46 = por %p44, %p45
      %p48 = scmp.ne.s32.totalorder %s31, %s47
      %p49 = scmp.eq.s32.totalorder %s23, 0
      %p50 = por %p48, %p49
      %s52 = sadd.s32 %s51, 1
      %p55 = scmp.eq.s32.totalorder %s17, 1
      %p56 = scmp.ne.s32.totalorder %s51, %s53
      %p57 = scmp.eq.s32.totalorder %s17, 0
      %p58 = por %p56, %p57
      %p59 = scmp.ne.s32.totalorder %s51, %s53
      %p60 = scmp.eq.s32.totalorder %s22, 1
      %p61 = por %p59, %p60
      %p62 = scmp.ne.s32.totalorder %s53, %s54
      %p63 = scmp.eq.s32.totalorder %s22, 0
      %p64 = por %p62, %p63
      %p65 = scmp.ne.s32.totalorder %s53, %s54
      %p66 = scmp.eq.s32.totalorder %s23, 1
      %p67 = por %p65, %p66
      %p69 = scmp.ne.s32.totalorder %s54, %s68
      %p70 = scmp.eq.s32.totalorder %s23, 0
      %p71 = por %p69, %p70
      %s73 = sadd.s32 %s72, 1
      %p76 = scmp.eq.s32.totalorder %s17, 1
      %p77 = scmp.ne.s32.totalorder %s72, %s74
      %p78 = scmp.eq.s32.totalorder %s17, 0
      %p79 = por %p77, %p78
      %p80 = scmp.ne.s32.totalorder %s72, %s74
      %p81 = scmp.eq.s32.totalorder %s22, 1
      %p82 = por %p80, %p81
      %p83 = scmp.ne.s32.totalorder %s74, %s75
      %p84 = scmp.eq.s32.totalorder %s22, 0
      %p85 = por %p83, %p84
      %p86 = scmp.ne.s32.totalorder %s74, %s75
      %p87 = scmp.eq.s32.totalorder %s23, 1
      %p88 = por %p86, %p87
      %p90 = scmp.ne.s32.totalorder %s75, %s89
      %p91 = scmp.eq.s32.totalorder %s23, 0
      %p92 = por %p90, %p91
      %s93 = ssub.s32 %s17, %s24
      %p94 = scmp.eq.s32.totalorder %s93, 0
      %s96 = sadd.s32 %s95, 1
      %s97 = scalar_select %p94, %s95, %s96
      %p100 = pneg %p94
      %p101 = scmp.eq.s32.totalorder %s17, 1
      %p102 = por %p100, %p101
      %p103 = scmp.ne.s32.totalorder %s95, %s98
      %p104 = scmp.eq.s32.totalorder %s17, 0
      %p105 = por %p103, %p104
      %p106 = scmp.ne.s32.totalorder %s95, %s98
      %p107 = scmp.eq.s32.totalorder %s22, 1
      %p108 = por %p106, %p107
      %p109 = scmp.ne.s32.totalorder %s98, %s99
      %p110 = scmp.eq.s32.totalorder %s22, 0
      %p111 = por %p109, %p110
      %p112 = scmp.ne.s32.totalorder %s98, %s99
      %p113 = scmp.eq.s32.totalorder %s23, 1
      %p114 = por %p112, %p113
      %p116 = scmp.ne.s32.totalorder %s99, %s115
      %p117 = scmp.eq.s32.totalorder %s23, 0
      %p118 = por %p116, %p117
      %p119 = scmp.le.s32.totalorder 1, %s17
      %p120 = scmp.lt.s32.totalorder %s17, 3
      %p121 = pnand %p119, %p120
      %p122 = pneg %p121
      // Predicated region
      $region9: #{tpu_custom_call.1} parent=5 // pred_check
        _
      $region10: #{tpu_custom_call.1} parent=5 // pred_check_branch
        %124 = sbr.rel (%p121) target = $region12
      $region11: #{tpu_custom_call.1} parent=5 // pred_region
        %s125 = ssub.s32 %s17, 1
        // Predicated region
        $region13: #{tpu_custom_call.1} parent=11 // pred_check
          %p126 = pneg %p64
        $region14: #{tpu_custom_call.1} parent=11 // pred_check_branch
          %128 = sbr.rel (%p126) target = $region16
        $region15: #{tpu_custom_call.1} parent=11 // pred_region
          %s130 = ssub.s32 64, 64
          %131 = vsyncadd [#allocation7], %s130
          %s133 = sshll.u32 [#allocation6], 4
          %s134 = int_to_ptr.vmem [resolvable:$true] %s133
          %136 = dma.hbm_to_vmem [thread:$0]  %s1, 64, %s134, [#allocation7]
        $region16: #{tpu_custom_call.1} parent=11 // pred_fallthru
          _
        // Predicated region
        $region17: #{tpu_custom_call.1} parent=11 // pred_check
          %p137 = pneg %p85
        $region18: #{tpu_custom_call.1} parent=11 // pred_check_branch
          %139 = sbr.rel (%p137) target = $region20
        $region19: #{tpu_custom_call.1} parent=11 // pred_region
          _
        $region20: #{tpu_custom_call.1} parent=11 // pred_fallthru
          _
      $region12: #{tpu_custom_call.1} parent=5 // pred_fallthru
        _
      %p140 = scmp.lt.s32.totalorder %s17, 2
      // Predicated region
      $region21: #{tpu_custom_call.1} parent=5 // pred_check
        %p141 = pneg %p140
      $region22: #{tpu_custom_call.1} parent=5 // pred_check_branch
        %143 = sbr.rel (%p141) target = $region24
      $region23: #{tpu_custom_call.1} parent=5 // pred_region
        // Predicated region
        $region25: #{tpu_custom_call.1} parent=23 // pred_check
          %p144 = pneg %p37
        $region26: #{tpu_custom_call.1} parent=23 // pred_check_branch
          %146 = sbr.rel (%p144) target = $region28
        $region27: #{tpu_custom_call.1} parent=23 // pred_region
          %s147 = sand.u32 %s27, 1
          %s148 = scalar_lea.sflag [#allocation4], %s147
          %s149 = sand.u32 %s27, 1
          %s150 = smul.addr %s149, 512
          %s151 = scalar_lea.vmem [#allocation3], %s150
          %s152 = smul.u32 16, %s17
          %s153 = ssub.s32 25, %s152
          %p154 = scmp.lt.s32.totalorder %s153, 16
          %s155 = scalar_select %p154, %s153, 16
          %s156 = smul.u32 128, %s155
          %s157 = smul.u32 %s156, 4
          %s159 = ssub.s32 8192, %s157
          %160 = vsyncadd %s148, %s159
          %p161 = scmp.ne.s32.totalorder 0, %s157
          %s162 = smul.addr %s152, 4
          %s163 = smul.addr %s162, 128
          %s164 = scalar_lea.hbm %s0, %s163
          %s165 = smul.u32 32, %s155
          %s166 = sshll.u32 %s151, 4
          %s167 = int_to_ptr.vmem [resolvable:$true] %s166
          %s168 = sshll.u32 %s165, 4
          %172 = dma.hbm_to_vmem [thread:$0]  (%p161), %s164, %s168, %s167, %s148, 512, 512, 32
        $region28: #{tpu_custom_call.1} parent=23 // pred_fallthru
          _
      $region24: #{tpu_custom_call.1} parent=5 // pred_fallthru
        _
      %p173 = scmp.le.s32.totalorder 1, %s17
      %p174 = scmp.lt.s32.totalorder %s17, 3
      %p175 = pnand %p173, %p174
      %p176 = pneg %p175
      // Predicated region
      $region29: #{tpu_custom_call.1} parent=5 // pred_check
        _
      $region30: #{tpu_custom_call.1} parent=5 // pred_check_branch
        %178 = sbr.rel (%p175) target = $region32
      $region31: #{tpu_custom_call.1} parent=5 // pred_region
        %s179 = ssub.s32 %s17, 1
        %s180 = sand.u32 %s30, 1
        %s181 = scalar_lea.sflag [#allocation4], %s180
        %s182 = sand.u32 %s30, 1
        %s183 = smul.addr %s182, 512
        %s184 = scalar_lea.vmem [#allocation3], %s183
        // Predicated region
        $region33: #{tpu_custom_call.1} parent=31 // pred_check
          %p185 = pneg %p43
        $region34: #{tpu_custom_call.1} parent=31 // pred_check_branch
          %187 = sbr.rel (%p185) target = $region36
        $region35: #{tpu_custom_call.1} parent=31 // pred_region
          %188 = dma.done %s181, 8192
        $region36: #{tpu_custom_call.1} parent=31 // pred_fallthru
          _
        // Predicated region
        $region37: #{tpu_custom_call.1} parent=31 // pred_check
          %p189 = pneg %p64
        $region38: #{tpu_custom_call.1} parent=31 // pred_check_branch
          %191 = sbr.rel (%p189) target = $region40
        $region39: #{tpu_custom_call.1} parent=31 // pred_region
          %192 = dma.done [#allocation7], 64
        $region40: #{tpu_custom_call.1} parent=31 // pred_fallthru
          _
        %s193 = sand.u32 %s30, 1
        %s194 = scalar_lea.sflag [#allocation4], %s193
        %s195 = sand.u32 %s30, 1
        %s196 = smul.addr %s195, 512
        %s197 = scalar_lea.vmem [#allocation3], %s196
        %p198 = pneg %p43
        %p199 = pneg %p40
        %p200 = pneg %p64
        %p201 = pneg %p61
        %p202 = pneg %p85
        %p203 = pneg %p82
        %p204 = pneg %p111
        %p205 = pneg %p108
        %s206 = sand.u32 %s98, 1
        %s207 = scalar_lea.sflag [#allocation5], %s206
        %s208 = sand.u32 %s98, 1
        %s209 = scalar_lea.vmem [#allocation8], %s208
        %s210 = smul.u32 16, %s22
        %s211 = ssub.s32 25, %s210
        %p212 = scmp.lt.s32.totalorder %s211, 16
        %s213 = scalar_select %p212, %s211, 16
        %s214 = smul.u32 128, %s213
        %s215 = smul.u32 %s214, 4
        %v216 = vld [vmem:[#allocation6] sm:$0xf]
        %v217 = vld [vmem:[%s184] sm:$0xff]
        %v218 = vld [vmem:[%s184 + $0x8] sm:$0xff]
        %v219 = vld [vmem:[%s184 + $0x10] sm:$0xff]
        %v220 = vld [vmem:[%s184 + $0x18] sm:$0xff]
        %v221 = vld [vmem:[%s184 + $0x20] sm:$0xff]
        %v222 = vld [vmem:[%s184 + $0x28] sm:$0xff]
        %v223 = vld [vmem:[%s184 + $0x30] sm:$0xff]
        %v224 = vld [vmem:[%s184 + $0x38] sm:$0xff]
        %v225 = vld [vmem:[%s184 + $0x40] sm:$0xff]
        %v226 = vld [vmem:[%s184 + $0x48] sm:$0xff]
        %v227 = vld [vmem:[%s184 + $0x50] sm:$0xff]
        %v228 = vld [vmem:[%s184 + $0x58] sm:$0xff]
        %v229 = vld [vmem:[%s184 + $0x60] sm:$0xff]
        %v230 = vld [vmem:[%s184 + $0x68] sm:$0xff]
        %v231 = vld [vmem:[%s184 + $0x70] sm:$0xff]
        %v232 = vld [vmem:[%s184 + $0x78] sm:$0xff]
        %v233 = vld [vmem:[%s184 + $0x80] sm:$0xff]
        %v234 = vld [vmem:[%s184 + $0x88] sm:$0xff]
        %v235 = vld [vmem:[%s184 + $0x90] sm:$0xff]
        %v236 = vld [vmem:[%s184 + $0x98] sm:$0xff]
        %v237 = vld [vmem:[%s184 + $0xa0] sm:$0xff]
        %v238 = vld [vmem:[%s184 + $0xa8] sm:$0xff]
        %v239 = vld [vmem:[%s184 + $0xb0] sm:$0xff]
        %v240 = vld [vmem:[%s184 + $0xb8] sm:$0xff]
        %v241 = vld [vmem:[%s184 + $0xc0] sm:$0xff]
        %v242 = vld [vmem:[%s184 + $0xc8] sm:$0xff]
        %v243 = vld [vmem:[%s184 + $0xd0] sm:$0xff]
        %v244 = vld [vmem:[%s184 + $0xd8] sm:$0xff]
        %v245 = vld [vmem:[%s184 + $0xe0] sm:$0xff]
        %v246 = vld [vmem:[%s184 + $0xe8] sm:$0xff]
        %v247 = vld [vmem:[%s184 + $0xf0] sm:$0xff]
        %v248 = vld [vmem:[%s184 + $0xf8] sm:$0xff]
        %v249 = vld [vmem:[%s184 + $0x100] sm:$0xff]
        %v250 = vld [vmem:[%s184 + $0x108] sm:$0xff]
        %v251 = vld [vmem:[%s184 + $0x110] sm:$0xff]
        %v252 = vld [vmem:[%s184 + $0x118] sm:$0xff]
        %v253 = vld [vmem:[%s184 + $0x120] sm:$0xff]
        %v254 = vld [vmem:[%s184 + $0x128] sm:$0xff]
        %v255 = vld [vmem:[%s184 + $0x130] sm:$0xff]
        %v256 = vld [vmem:[%s184 + $0x138] sm:$0xff]
        %v257 = vld [vmem:[%s184 + $0x140] sm:$0xff]
        %v258 = vld [vmem:[%s184 + $0x148] sm:$0xff]
        %v259 = vld [vmem:[%s184 + $0x150] sm:$0xff]
        %v260 = vld [vmem:[%s184 + $0x158] sm:$0xff]
        %v261 = vld [vmem:[%s184 + $0x160] sm:$0xff]
        %v262 = vld [vmem:[%s184 + $0x168] sm:$0xff]
        %v263 = vld [vmem:[%s184 + $0x170] sm:$0xff]
        %v264 = vld [vmem:[%s184 + $0x178] sm:$0xff]
        %v265 = vld [vmem:[%s184 + $0x180] sm:$0xff]
        %v266 = vld [vmem:[%s184 + $0x188] sm:$0xff]
        %v267 = vld [vmem:[%s184 + $0x190] sm:$0xff]
        %v268 = vld [vmem:[%s184 + $0x198] sm:$0xff]
        %v269 = vld [vmem:[%s184 + $0x1a0] sm:$0xff]
        %v270 = vld [vmem:[%s184 + $0x1a8] sm:$0xff]
        %v271 = vld [vmem:[%s184 + $0x1b0] sm:$0xff]
        %v272 = vld [vmem:[%s184 + $0x1b8] sm:$0xff]
        %v273 = vld [vmem:[%s184 + $0x1c0] sm:$0xff]
        %v274 = vld [vmem:[%s184 + $0x1c8] sm:$0xff]
        %v275 = vld [vmem:[%s184 + $0x1d0] sm:$0xff]
        %v276 = vld [vmem:[%s184 + $0x1d8] sm:$0xff]
        %v277 = vld [vmem:[%s184 + $0x1e0] sm:$0xff]
        %v278 = vld [vmem:[%s184 + $0x1e8] sm:$0xff]
        %v279 = vld [vmem:[%s184 + $0x1f0] sm:$0xff]
        %v280 = vld [vmem:[%s184 + $0x1f8] sm:$0xff]
        %s281 = sld [smem:[#allocation2]]
        %v282 = vstv %s281
        %v284 = vlaneseq
        %v285 = vshrl.u32 %v284, 7
        %v286 = vsub.s32 0, %v285
        %v287 = vrot.slane %v216, %v286
        %v288 = vlaneseq
        %v289 = vshrl.u32 %v288, 7
        %v290 = vsub.s32 1, %v289
        %v291 = vrot.slane %v216, %v290
        %v292 = vlaneseq
        %v293 = vshrl.u32 %v292, 7
        %v294 = vsub.s32 2, %v293
        %v295 = vrot.slane %v216, %v294
        %v296 = vlaneseq
        %v297 = vshrl.u32 %v296, 7
        %v298 = vsub.s32 3, %v297
        %v299 = vrot.slane %v216, %v298
        %304 = vmatprep.subr.mxu0 %v278
        %305 = vmatpush1.xpose.msra.mxu0 %v277
        %306 = vmatprep.subr.mxu0 %v274
        %307 = vmatpush1.xpose.msra.mxu0 %v273
        %308 = vmatprep.subr.mxu0 %v270
        %309 = vmatpush1.xpose.msra.mxu0 %v269
        %310 = vmatprep.subr.mxu0 %v266
        %311 = vmatpush1.xpose.msra.mxu0 %v265
        %312 = vmatprep.subr.mxu0 %v262
        %313 = vmatpush1.xpose.msra.mxu0 %v261
        %314 = vmatprep.subr.mxu0 %v258
        %315 = vmatpush1.xpose.msra.mxu0 %v257
        %316 = vmatprep.subr.mxu0 %v254
        %317 = vmatpush1.xpose.msra.mxu0 %v253
        %318 = vmatprep.subr.mxu0 %v250
        %319 = vmatpush1.xpose.msra.mxu0 %v249
        %320 = vmatprep.subr.mxu0 %v246
        %321 = vmatpush1.xpose.msra.mxu0 %v245
        %322 = vmatprep.subr.mxu0 %v242
        %323 = vmatpush1.xpose.msra.mxu0 %v241
        %324 = vmatprep.subr.mxu0 %v238
        %325 = vmatpush1.xpose.msra.mxu0 %v237
        %326 = vmatprep.subr.mxu0 %v234
        %327 = vmatpush1.xpose.msra.mxu0 %v233
        %328 = vmatprep.subr.mxu0 %v230
        %329 = vmatpush1.xpose.msra.mxu0 %v229
        %330 = vmatprep.subr.mxu0 %v226
        %331 = vmatpush1.xpose.msra.mxu0 %v225
        %332 = vmatprep.subr.mxu0 %v222
        %333 = vmatpush1.xpose.msra.mxu0 %v221
        %334 = vmatprep.subr.mxu0 %v218
        %335 = vmatpush1.xpose.msra.mxu0 %v217
        %336 = vmatprep.subr.mxu0 0.0
        %337 = vmatpush2.xpose.msra.mxu0 0.0
        %338 = vmatprep.subr.mxu0 0.0
        %339 = vmatpush2.xpose.msra.mxu0 0.0
        %340 = vmatprep.subr.mxu0 0.0
        %341 = vmatpush2.xpose.msra.mxu0 0.0
        %342 = vmatprep.subr.mxu0 0.0
        %343 = vmatpush2.xpose.msra.mxu0 0.0
        %344 = vmatprep.subr.mxu0 0.0
        %345 = vmatpush2.xpose.msra.mxu0 0.0
        %346 = vmatprep.subr.mxu0 0.0
        %347 = vmatpush2.xpose.msra.mxu0 0.0
        %348 = vmatprep.subr.mxu0 0.0
        %349 = vmatpush2.xpose.msra.mxu0 0.0
        %350 = vmatprep.subr.mxu0 0.0
        %351 = vmatpush2.xpose.msra.mxu0 0.0
        %352 = vmatprep.subr.mxu0 0.0
        %353 = vmatpush2.xpose.msra.mxu0 0.0
        %354 = vmatprep.subr.mxu0 0.0
        %355 = vmatpush2.xpose.msra.mxu0 0.0
        %356 = vmatprep.subr.mxu0 0.0
        %357 = vmatpush2.xpose.msra.mxu0 0.0
        %358 = vmatprep.subr.mxu0 0.0
        %359 = vmatpush2.xpose.msra.mxu0 0.0
        %360 = vmatprep.subr.mxu0 0.0
        %361 = vmatpush2.xpose.msra.mxu0 0.0
        %362 = vmatprep.subr.mxu0 0.0
        %363 = vmatpush2.xpose.msra.mxu0 0.0
        %364 = vmatprep.subr.mxu0 0.0
        %365 = vmatpush2.xpose.msra.mxu0 0.0
        %366 = vmatprep.subr.mxu0 0.0
        %367 = vmatpush2.xpose.msra.mxu0 0.0
        %368 = vmatprep.mubr.f32.mxu0 %v291
        %369 = vmatmul.mubr.f32.gmra.mxu0 %v287
        %v370 = vpop.f32.mrf.mxu0
        %v371 = vadd.f32 %v282, %v370
        %v372 = vpop.f32.mrf.mxu0
        %373 = vdwg.mxu0
        %374 = vmatprep.subr.mxu0 %v280
        %375 = vmatpush1.xpose.msra.mxu0 %v279
        %376 = vmatprep.subr.mxu0 %v276
        %377 = vmatpush1.xpose.msra.mxu0 %v275
        %378 = vmatprep.subr.mxu0 %v272
        %379 = vmatpush1.xpose.msra.mxu0 %v271
        %380 = vmatprep.subr.mxu0 %v268
        %381 = vmatpush1.xpose.msra.mxu0 %v267
        %382 = vmatprep.subr.mxu0 %v264
        %383 = vmatpush1.xpose.msra.mxu0 %v263
        %384 = vmatprep.subr.mxu0 %v260
        %385 = vmatpush1.xpose.msra.mxu0 %v259
        %386 = vmatprep.subr.mxu0 %v256
        %387 = vmatpush1.xpose.msra.mxu0 %v255
        %388 = vmatprep.subr.mxu0 %v252
        %389 = vmatpush1.xpose.msra.mxu0 %v251
        %390 = vmatprep.subr.mxu0 %v248
        %391 = vmatpush1.xpose.msra.mxu0 %v247
        %392 = vmatprep.subr.mxu0 %v244
        %393 = vmatpush1.xpose.msra.mxu0 %v243
        %394 = vmatprep.subr.mxu0 %v240
        %395 = vmatpush1.xpose.msra.mxu0 %v239
        %396 = vmatprep.subr.mxu0 %v236
        %397 = vmatpush1.xpose.msra.mxu0 %v235
        %398 = vmatprep.subr.mxu0 %v232
        %399 = vmatpush1.xpose.msra.mxu0 %v231
        %400 = vmatprep.subr.mxu0 %v228
        %401 = vmatpush1.xpose.msra.mxu0 %v227
        %402 = vmatprep.subr.mxu0 %v224
        %403 = vmatpush1.xpose.msra.mxu0 %v223
        %404 = vmatprep.subr.mxu0 %v220
        %405 = vmatpush1.xpose.msra.mxu0 %v219
        %406 = vmatprep.subr.mxu0 0.0
        %407 = vmatpush2.xpose.msra.mxu0 0.0
        %408 = vmatprep.subr.mxu0 0.0
        %409 = vmatpush2.xpose.msra.mxu0 0.0
        %410 = vmatprep.subr.mxu0 0.0
        %411 = vmatpush2.xpose.msra.mxu0 0.0
        %412 = vmatprep.subr.mxu0 0.0
        %413 = vmatpush2.xpose.msra.mxu0 0.0
        %414 = vmatprep.subr.mxu0 0.0
        %415 = vmatpush2.xpose.msra.mxu0 0.0
        %416 = vmatprep.subr.mxu0 0.0
        %417 = vmatpush2.xpose.msra.mxu0 0.0
        %418 = vmatprep.subr.mxu0 0.0
        %419 = vmatpush2.xpose.msra.mxu0 0.0
        %420 = vmatprep.subr.mxu0 0.0
        %421 = vmatpush2.xpose.msra.mxu0 0.0
        %422 = vmatprep.subr.mxu0 0.0
        %423 = vmatpush2.xpose.msra.mxu0 0.0
        %424 = vmatprep.subr.mxu0 0.0
        %425 = vmatpush2.xpose.msra.mxu0 0.0
        %426 = vmatprep.subr.mxu0 0.0
        %427 = vmatpush2.xpose.msra.mxu0 0.0
        %428 = vmatprep.subr.mxu0 0.0
        %429 = vmatpush2.xpose.msra.mxu0 0.0
        %430 = vmatprep.subr.mxu0 0.0
        %431 = vmatpush2.xpose.msra.mxu0 0.0
        %432 = vmatprep.subr.mxu0 0.0
        %433 = vmatpush2.xpose.msra.mxu0 0.0
        %434 = vmatprep.subr.mxu0 0.0
        %435 = vmatpush2.xpose.msra.mxu0 0.0
        %436 = vmatprep.subr.mxu0 0.0
        %437 = vmatpush2.xpose.msra.mxu0 0.0
        %438 = vmatprep.mubr.f32.mxu0 %v299
        %439 = vmatmul.mubr.f32.gmra.mxu0 %v295
        %v440 = vpop.f32.mrf.mxu0
        %v441 = vadd.f32 %v371, %v440
        %v442 = vpop.f32.mrf.mxu0
        %443 = vdwg.mxu0
        %444 = vst [vmem:[%s209] sm:$0x1] %v441
        %s445 = sand.u32 %s98, 1
        %s446 = scalar_lea.sflag [#allocation5], %s445
        %s447 = sand.u32 %s98, 1
        %s448 = scalar_lea.vmem [#allocation8], %s447
        // Predicated region
        $region41: #{tpu_custom_call.1} parent=31 // pred_check
          %p449 = pneg %p108
        $region42: #{tpu_custom_call.1} parent=31 // pred_check_branch
          %451 = sbr.rel (%p449) target = $region44
        $region43: #{tpu_custom_call.1} parent=31 // pred_region
          %s453 = ssub.s32 16, 16
          %454 = vsyncadd %s446, %s453
          %s455 = smul.addr %s22, 16
          %s456 = scalar_lea.hbm %s3, %s455
          %s458 = sshll.u32 %s448, 4
          %s459 = int_to_ptr.vmem [resolvable:$true] %s458
          %461 = dma.vmem_to_hbm [thread:$0]  %s459, 16, %s456, %s446
        $region44: #{tpu_custom_call.1} parent=31 // pred_fallthru
          _
      $region32: #{tpu_custom_call.1} parent=5 // pred_fallthru
        _
      %p462 = scmp.le.s32.totalorder 2, %s17
      // Predicated region
      $region45: #{tpu_custom_call.1} parent=5 // pred_check
        %p463 = pneg %p462
      $region46: #{tpu_custom_call.1} parent=5 // pred_check_branch
        %465 = sbr.rel (%p463) target = $region48
      $region47: #{tpu_custom_call.1} parent=5 // pred_region
        %s466 = ssub.s32 %s17, 2
        // Predicated region
        $region49: #{tpu_custom_call.1} parent=47 // pred_check
          %p467 = pneg %p114
        $region50: #{tpu_custom_call.1} parent=47 // pred_check_branch
          %469 = sbr.rel (%p467) target = $region52
        $region51: #{tpu_custom_call.1} parent=47 // pred_region
          %s470 = sand.u32 %s99, 1
          %s471 = scalar_lea.sflag [#allocation5], %s470
          %s472 = sand.u32 %s99, 1
          %s473 = scalar_lea.vmem [#allocation8], %s472
          %474 = dma.done %s471, 16
        $region52: #{tpu_custom_call.1} parent=47 // pred_fallthru
          _
      $region48: #{tpu_custom_call.1} parent=5 // pred_fallthru
        _
    $region6: #{tpu_custom_call.1} parent=1 // loop_footer
      %s21 = sadd.s32 1, %s17
    $region7: #{tpu_custom_call.1} parent=1 // loop_footer_branch
      %16 = sbr.rel target = $region3
    $region8: #{tpu_custom_call.1} parent=1 // loop_exit
      _
    %475 = vsyncpa [#allocation4], 1
    %s476 = scalar_lea.sflag [#allocation4], 1
    %477 = vsyncpa %s476, 1
    %478 = vsyncpa [#allocation7], 1
    %479 = vsyncpa [#allocation5], 1
    %s480 = scalar_lea.sflag [#allocation5], 1
    %481 = vsyncpa %s480, 1

</llo_original>
